<compile_context>
chip_gen: v5e
topology: v5e:2x2
jax: 0.10.0
libtpu: 0.0.40
codegen_flags: <defaults>
</compile_context>

<pallas_src>
import functools

import jax
import jax.numpy as jnp
from jax import lax
from jax.experimental import pallas as pl
from jax.experimental.pallas import tpu as pltpu

MSE_WEIGHT = 0.4
L1_WEIGHT = 0.4
COSINE_WEIGHT = 0.2
EPS = 1e-8  # torch F.cosine_similarity default eps

_TILE_TARGET_BYTES = 2 * 1024 * 1024   # ~2 MiB VMEM footprint per input block


def _make_kernel(C, K, CP, TILE, SP, ragged):
    """Build the kernel body with all shape constants closed over."""
    EPS2 = EPS * EPS

    def channel_reduce(x):
        # x: (CP, TILE) f32 -> per-spatial-position channel sums.
        if K == 1:
            return jnp.sum(x, axis=0, keepdims=True)          # (1, TILE)
        # Packed case (CP == 8): row c*K + k holds channel c of spatial chunk k.
        # Summing x rotated by every multiple of K (the full subgroup of Z/8
        # generated by K) puts, in EVERY row j, the sum over all rows congruent
        # to j (mod K).  So each row is a valid channel-sum; each spatial
        # position appears in C duplicate rows (divided out in the wrapper).
        # Uses XLU sublane rolls; direction-agnostic because the shift set is
        # symmetric mod 8.
        acc = x
        for c in range(1, C):
            acc = acc + pltpu.roll(x, shift=c * K, axis=0)
        return acc                                            # (8, TILE)

    def kernel(g_ref, r_ref, out_ref, acc_sq, acc_abs, acc_cos):
        b = pl.program_id(0)
        s = pl.program_id(1)
        nb = pl.num_programs(0)
        ns = pl.num_programs(1)

        @pl.when(jnp.logical_and(b == 0, s == 0))
        def _init():
            acc_sq[...] = jnp.zeros_like(acc_sq)
            acc_abs[...] = jnp.zeros_like(acc_abs)
            acc_cos[...] = jnp.zeros_like(acc_cos)

        def body(mask):
            g = g_ref[...].astype(jnp.float32)                # (CP, TILE)
            r = r_ref[...].astype(jnp.float32)

            d = g - r
            if mask is not None:
                # Select (not multiply) so NaN/Inf garbage in OOB lanes is killed.
                d = jnp.where(mask, d, 0.0)
            acc_sq[...] += d * d
            acc_abs[...] += jnp.abs(d)

            # Cosine similarity over channels.
            dot = channel_reduce(g * r)
            gg = channel_reduce(g * g)
            rr = channel_reduce(r * r)
            # torch clamps each norm separately: x / max(||x||, eps).
            inv_g = lax.rsqrt(jnp.maximum(gg, EPS2))
            inv_r = lax.rsqrt(jnp.maximum(rr, EPS2))
            cos = dot * (inv_g * inv_r)
            if mask is not None:
                cos = jnp.where(mask, cos, 0.0)
            acc_cos[...] += cos

        if ragged:
            # Only the ragged last spatial tile pays for the lane mask; the
            # steady-state hot path runs fully unmasked.
            @pl.when(s < ns - 1)
            def _steady():
                body(None)

            @pl.when(s == ns - 1)
            def _tail():
                lane = lax.broadcasted_iota(jnp.int32, (1, TILE), 1)
                mask = (s * TILE + lane) < SP                  # (1, TILE)
                body(mask)
        else:
            body(None)

        @pl.when(jnp.logical_and(b == nb - 1, s == ns - 1))
        def _finalize():
            sum_sq = jnp.sum(acc_sq[...])
            sum_abs = jnp.sum(acc_abs[...])
            sum_cos = jnp.sum(acc_cos[...])
            lane_o = lax.broadcasted_iota(jnp.int32, (8, 128), 1)
            out_ref[...] = jnp.where(
                lane_o == 0, sum_sq,
                jnp.where(lane_o == 1, sum_abs,
                          jnp.where(lane_o == 2, sum_cos, 0.0))
            ).astype(jnp.float32)

    return kernel


@functools.partial(jax.jit,
                   static_argnames=("mse_weight", "l1_weight", "cosine_weight"))
def loli_loss(generated_latent, real_latent,
              mse_weight=MSE_WEIGHT, l1_weight=L1_WEIGHT,
              cosine_weight=COSINE_WEIGHT):
    """Pallas implementation of LoliLoss.forward for NCHW latents."""
    assert generated_latent.shape == real_latent.shape
    B, C, H, W = generated_latent.shape
    S = H * W

    # Sublane-pack small channel counts: view (B, C, S) as (B, C*K, S/K) with
    # K = 8//C.  Free row-major reshape (channel c, chunk k -> sublane c*K + k);
    # restores full 8-sublane f32 vreg occupancy for C in {1, 2, 4}.
    if C < 8 and 8 % C == 0 and S % (8 // C) == 0:
        K = 8 // C
    else:
        K = 1
    CP = C * K
    SP = S // K

    g = generated_latent.reshape(B, CP, SP)
    r = real_latent.reshape(B, CP, SP)

    # Lane-dense tile along SP; sized by the *padded* VMEM footprint per block
    # (sublanes pad to multiples of 8) so double-buffered inputs + scratch fit
    # the default scoped VMEM on every TPU generation.
    padded_rows = -(-CP // 8) * 8
    cap = max(128, (_TILE_TARGET_BYTES // (padded_rows * 4)) // 128 * 128)
    if SP <= cap:
        TILE = SP            # full extent -> always a legal block shape
    else:
        TILE = cap           # multiple of 128; last tile may be ragged
    num_tiles = pl.cdiv(SP, TILE)
    ragged = (SP % TILE) != 0

    cos_rows = CP if K > 1 else 1
    kernel = _make_kernel(C, K, CP, TILE, SP, ragged)

    in_spec = pl.BlockSpec((None, CP, TILE), lambda b, s: (b, 0, s))

    sums = pl.pallas_call(
        kernel,
        out_shape=jax.ShapeDtypeStruct((8, 128), jnp.float32),
        grid_spec=pltpu.PrefetchScalarGridSpec(
            num_scalar_prefetch=0,
            grid=(B, num_tiles),
            in_specs=[in_spec, in_spec],
            out_specs=pl.BlockSpec((8, 128), lambda b, s: (0, 0)),
            scratch_shapes=[
                pltpu.VMEM((CP, TILE), jnp.float32),          # sum of (g-r)^2
                pltpu.VMEM((CP, TILE), jnp.float32),          # sum of |g-r|
                pltpu.VMEM((cos_rows, TILE), jnp.float32),    # sum of per-pixel cos
            ]),
        compiler_params=pltpu.CompilerParams(
            # Both grid axes reduce into the same resident VMEM accumulators.
            # (v7x next step: CORE_PARALLEL-shard the batch axis with per-core
            # partials; plain "parallel" does not change codegen.)
            dimension_semantics=("arbitrary", "arbitrary"),
            vmem_limit_bytes=32 * 1024 * 1024),
    )(g, r)

    sum_sq = sums[0, 0]
    sum_abs = sums[0, 1]
    # When packed (K > 1), each spatial position's cosine is accumulated in C
    # duplicate sublane rows -> divide the duplication out.
    cos_dup = float(C) if K > 1 else 1.0
    sum_cos = sums[0, 2] / cos_dup

    n_elems = B * C * H * W      # MSE / L1 mean denominator
    n_pix = B * H * W            # cosine similarity output count
    mse_loss = sum_sq / n_elems
    l1_loss = sum_abs / n_elems
    cosine_loss = 1.0 - sum_cos / n_pix

    return (mse_weight * mse_loss + l1_weight * l1_loss
            + cosine_weight * cosine_loss)


def _loli_loss_ref(g, r):
    """Pure-JAX reference matching the PyTorch forward (per-norm eps clamp)."""
    d = g - r
    mse = jnp.mean(d * d)
    l1 = jnp.mean(jnp.abs(d))
    dot = jnp.sum(g * r, axis=1)
    ng = jnp.maximum(jnp.sqrt(jnp.sum(g * g, axis=1)), EPS)
    nr = jnp.maximum(jnp.sqrt(jnp.sum(r * r, axis=1)), EPS)
    cos = dot / (ng * nr)
    cosine = 1.0 - jnp.mean(cos)
    return MSE_WEIGHT * mse + L1_WEIGHT * l1 + COSINE_WEIGHT * cosine


if __name__ == "__main__":
    key = jax.random.PRNGKey(0)
    k1, k2 = jax.random.split(key)
    B, C, H, W = 2, 4, 16, 16
    generated = jax.random.normal(k1, (B, C, H, W), dtype=jnp.float32)
    real = jax.random.normal(k2, (B, C, H, W), dtype=jnp.float32)

    out = loli_loss(generated, real)
    out = jax.block_until_ready(out)

    ref = _loli_loss_ref(generated, real)
    assert jnp.allclose(out, ref, rtol=1e-5, atol=1e-5), (out, ref)

    print("KERNEL_OK")
</pallas_src>

<mosaic_0001>
module attributes {stable_mosaic.version = 11 : i64} {
  func.func @kernel(%arg0: i32, %arg1: i32, %arg2: memref<1x8x128xf32, #tpu.memory_space<vmem>>, %arg3: memref<1x8x128xf32, #tpu.memory_space<vmem>>, %arg4: memref<8x128xf32, #tpu.memory_space<vmem>>, %arg5: memref<8x128xf32, #tpu.memory_space<vmem>>, %arg6: memref<8x128xf32, #tpu.memory_space<vmem>>, %arg7: memref<8x128xf32, #tpu.memory_space<vmem>>) attributes {dimension_semantics = [#tpu.dimension_semantics<arbitrary>, #tpu.dimension_semantics<arbitrary>], iteration_bounds = array<i64: 2, 1>, scalar_prefetch = 0 : i64, scratch_operands = 3 : i64, tpu.core_type = #tpu.core_type<tc>, window_params = [{transform_indices = @transform_0, window_bounds = array<i64: 1, 8, 128>}, {transform_indices = @transform_1, window_bounds = array<i64: 1, 8, 128>}, {pipeline_mode = #tpu.pipeline_mode<synchronous>, transform_indices = @transform_2, window_bounds = array<i64: 8, 128>}]} {
    %c0_i32 = arith.constant 0 : i32
    %0 = arith.cmpi eq, %arg0, %c0_i32 : i32
    %c0_i32_0 = arith.constant 0 : i32
    %1 = arith.cmpi eq, %arg1, %c0_i32_0 : i32
    %2 = arith.andi %0, %1 : i1
    %3 = arith.extui %2 : i1 to i32
    %c0_i32_1 = arith.constant 0 : i32
    %4 = arith.cmpi ne, %3, %c0_i32_1 : i32
    scf.if %4 {
      %cst_28 = arith.constant 0.000000e+00 : f32
      %55 = vector.broadcast %cst_28 : f32 to vector<8x128xf32>
      %c0_29 = arith.constant 0 : index
      %c0_30 = arith.constant 0 : index
      %56 = vector.load %arg5[%c0_29, %c0_30] : memref<8x128xf32, #tpu.memory_space<vmem>>, vector<8x128xf32>
      tpu.vector_store %arg5[%c0_29, %c0_30], %55 {strides = array<i32>} : memref<8x128xf32, #tpu.memory_space<vmem>>, vector<8x128xf32>,
      %cst_31 = arith.constant 0.000000e+00 : f32
      %57 = vector.broadcast %cst_31 : f32 to vector<8x128xf32>
      %c0_32 = arith.constant 0 : index
      %c0_33 = arith.constant 0 : index
      %58 = vector.load %arg6[%c0_32, %c0_33] : memref<8x128xf32, #tpu.memory_space<vmem>>, vector<8x128xf32>
      tpu.vector_store %arg6[%c0_32, %c0_33], %57 {strides = array<i32>} : memref<8x128xf32, #tpu.memory_space<vmem>>, vector<8x128xf32>,
      %cst_34 = arith.constant 0.000000e+00 : f32
      %59 = vector.broadcast %cst_34 : f32 to vector<8x128xf32>
      %c0_35 = arith.constant 0 : index
      %c0_36 = arith.constant 0 : index
      %60 = vector.load %arg7[%c0_35, %c0_36] : memref<8x128xf32, #tpu.memory_space<vmem>>, vector<8x128xf32>
      tpu.vector_store %arg7[%c0_35, %c0_36], %59 {strides = array<i32>} : memref<8x128xf32, #tpu.memory_space<vmem>>, vector<8x128xf32>,
    } else {
    }
    %c0 = arith.constant 0 : index
    %c0_2 = arith.constant 0 : index
    %c0_3 = arith.constant 0 : index
    %5 = vector.load %arg2[%c0, %c0_2, %c0_3] : memref<1x8x128xf32, #tpu.memory_space<vmem>>, vector<1x8x128xf32>
    %6 = vector.shape_cast %5 : vector<1x8x128xf32> to vector<8x128xf32>
    %c0_4 = arith.constant 0 : index
    %c0_5 = arith.constant 0 : index
    %c0_6 = arith.constant 0 : index
    %7 = vector.load %arg3[%c0_4, %c0_5, %c0_6] : memref<1x8x128xf32, #tpu.memory_space<vmem>>, vector<1x8x128xf32>
    %8 = vector.shape_cast %7 : vector<1x8x128xf32> to vector<8x128xf32>
    %9 = arith.subf %6, %8 : vector<8x128xf32>
    %c0_7 = arith.constant 0 : index
    %c0_8 = arith.constant 0 : index
    %10 = vector.load %arg5[%c0_7, %c0_8] : memref<8x128xf32, #tpu.memory_space<vmem>>, vector<8x128xf32>
    %11 = arith.mulf %9, %9 : vector<8x128xf32>
    %12 = arith.addf %10, %11 : vector<8x128xf32>
    %c0_9 = arith.constant 0 : index
    %c0_10 = arith.constant 0 : index
    %13 = vector.load %arg5[%c0_9, %c0_10] : memref<8x128xf32, #tpu.memory_space<vmem>>, vector<8x128xf32>
    tpu.vector_store %arg5[%c0_9, %c0_10], %12 {strides = array<i32>} : memref<8x128xf32, #tpu.memory_space<vmem>>, vector<8x128xf32>,
    %c0_11 = arith.constant 0 : index
    %c0_12 = arith.constant 0 : index
    %14 = vector.load %arg6[%c0_11, %c0_12] : memref<8x128xf32, #tpu.memory_space<vmem>>, vector<8x128xf32>
    %15 = math.absf %9 : vector<8x128xf32>
    %16 = arith.addf %14, %15 : vector<8x128xf32>
    %c0_13 = arith.constant 0 : index
    %c0_14 = arith.constant 0 : index
    %17 = vector.load %arg6[%c0_13, %c0_14] : memref<8x128xf32, #tpu.memory_space<vmem>>, vector<8x128xf32>
    tpu.vector_store %arg6[%c0_13, %c0_14], %16 {strides = array<i32>} : memref<8x128xf32, #tpu.memory_space<vmem>>, vector<8x128xf32>,
    %18 = arith.mulf %6, %8 : vector<8x128xf32>
    %c2_i32 = arith.constant 2 : i32
    %19 = tpu.dynamic_rotate %18 by %c2_i32 dim 0 : vector<8x128xf32>, i32 -> vector<8x128xf32>
    %20 = arith.addf %18, %19 : vector<8x128xf32>
    %c4_i32 = arith.constant 4 : i32
    %21 = tpu.dynamic_rotate %18 by %c4_i32 dim 0 : vector<8x128xf32>, i32 -> vector<8x128xf32>
    %22 = arith.addf %20, %21 : vector<8x128xf32>
    %c6_i32 = arith.constant 6 : i32
    %23 = tpu.dynamic_rotate %18 by %c6_i32 dim 0 : vector<8x128xf32>, i32 -> vector<8x128xf32>
    %24 = arith.addf %22, %23 : vector<8x128xf32>
    %25 = arith.mulf %6, %6 : vector<8x128xf32>
    %c2_i32_15 = arith.constant 2 : i32
    %26 = tpu.dynamic_rotate %25 by %c2_i32_15 dim 0 : vector<8x128xf32>, i32 -> vector<8x128xf32>
    %27 = arith.addf %25, %26 : vector<8x128xf32>
    %c4_i32_16 = arith.constant 4 : i32
    %28 = tpu.dynamic_rotate %25 by %c4_i32_16 dim 0 : vector<8x128xf32>, i32 -> vector<8x128xf32>
    %29 = arith.addf %27, %28 : vector<8x128xf32>
    %c6_i32_17 = arith.constant 6 : i32
    %30 = tpu.dynamic_rotate %25 by %c6_i32_17 dim 0 : vector<8x128xf32>, i32 -> vector<8x128xf32>
    %31 = arith.addf %29, %30 : vector<8x128xf32>
    %32 = arith.mulf %8, %8 : vector<8x128xf32>
    %c2_i32_18 = arith.constant 2 : i32
    %33 = tpu.dynamic_rotate %32 by %c2_i32_18 dim 0 : vector<8x128xf32>, i32 -> vector<8x128xf32>
    %34 = arith.addf %32, %33 : vector<8x128xf32>
    %c4_i32_19 = arith.constant 4 : i32
    %35 = tpu.dynamic_rotate %32 by %c4_i32_19 dim 0 : vector<8x128xf32>, i32 -> vector<8x128xf32>
    %36 = arith.addf %34, %35 : vector<8x128xf32>
    %c6_i32_20 = arith.constant 6 : i32
    %37 = tpu.dynamic_rotate %32 by %c6_i32_20 dim 0 : vector<8x128xf32>, i32 -> vector<8x128xf32>
    %38 = arith.addf %36, %37 : vector<8x128xf32>
    %cst = arith.constant 1.000000e-16 : f32
    %39 = vector.broadcast %cst : f32 to vector<8x128xf32>
    %40 = arith.maximumf %31, %39 : vector<8x128xf32>
    %41 = math.rsqrt %40 : vector<8x128xf32>
    %cst_21 = arith.constant 1.000000e-16 : f32
    %42 = vector.broadcast %cst_21 : f32 to vector<8x128xf32>
    %43 = arith.maximumf %38, %42 : vector<8x128xf32>
    %44 = math.rsqrt %43 : vector<8x128xf32>
    %45 = arith.mulf %41, %44 : vector<8x128xf32>
    %46 = arith.mulf %24, %45 : vector<8x128xf32>
    %c0_22 = arith.constant 0 : index
    %c0_23 = arith.constant 0 : index
    %47 = vector.load %arg7[%c0_22, %c0_23] : memref<8x128xf32, #tpu.memory_space<vmem>>, vector<8x128xf32>
    %48 = arith.addf %47, %46 : vector<8x128xf32>
    %c0_24 = arith.constant 0 : index
    %c0_25 = arith.constant 0 : index
    %49 = vector.load %arg7[%c0_24, %c0_25] : memref<8x128xf32, #tpu.memory_space<vmem>>, vector<8x128xf32>
    tpu.vector_store %arg7[%c0_24, %c0_25], %48 {strides = array<i32>} : memref<8x128xf32, #tpu.memory_space<vmem>>, vector<8x128xf32>,
    %c1_i32 = arith.constant 1 : i32
    %50 = arith.cmpi eq, %arg0, %c1_i32 : i32
    %c0_i32_26 = arith.constant 0 : i32
    %51 = arith.cmpi eq, %arg1, %c0_i32_26 : i32
    %52 = arith.andi %50, %51 : i1
    %53 = arith.extui %52 : i1 to i32
    %c0_i32_27 = arith.constant 0 : i32
    %54 = arith.cmpi ne, %53, %c0_i32_27 : i32
    scf.if %54 {
      %c0_28 = arith.constant 0 : index
      %c0_29 = arith.constant 0 : index
      %55 = vector.load %arg5[%c0_28, %c0_29] : memref<8x128xf32, #tpu.memory_space<vmem>>, vector<8x128xf32>
      %56 = vector.shape_cast %55 : vector<8x128xf32> to vector<1x8x128xf32>
      %cst_30 = arith.constant dense<0.000000e+00> : vector<1xf32>
      %57 = vector.multi_reduction <add>, %56, %cst_30 [1, 2] : vector<1x8x128xf32> to vector<1xf32>
      %58 = vector.shape_cast %57 : vector<1xf32> to vector<1x1x1xf32>
      %59 = vector.extract %58[0, 0, 0] : f32 from vector<1x1x1xf32>
      %c0_31 = arith.constant 0 : index
      %c0_32 = arith.constant 0 : index
      %60 = vector.load %arg6[%c0_31, %c0_32] : memref<8x128xf32, #tpu.memory_space<vmem>>, vector<8x128xf32>
      %61 = vector.shape_cast %60 : vector<8x128xf32> to vector<1x8x128xf32>
      %cst_33 = arith.constant dense<0.000000e+00> : vector<1xf32>
      %62 = vector.multi_reduction <add>, %61, %cst_33 [1, 2] : vector<1x8x128xf32> to vector<1xf32>
      %63 = vector.shape_cast %62 : vector<1xf32> to vector<1x1x1xf32>
      %64 = vector.extract %63[0, 0, 0] : f32 from vector<1x1x1xf32>
      %c0_34 = arith.constant 0 : index
      %c0_35 = arith.constant 0 : index
      %65 = vector.load %arg7[%c0_34, %c0_35] : memref<8x128xf32, #tpu.memory_space<vmem>>, vector<8x128xf32>
      %66 = vector.shape_cast %65 : vector<8x128xf32> to vector<1x8x128xf32>
      %cst_36 = arith.constant dense<0.000000e+00> : vector<1xf32>
      %67 = vector.multi_reduction <add>, %66, %cst_36 [1, 2] : vector<1x8x128xf32> to vector<1xf32>
      %68 = vector.shape_cast %67 : vector<1xf32> to vector<1x1x1xf32>
      %69 = vector.extract %68[0, 0, 0] : f32 from vector<1x1x1xf32>
      %70 = tpu.iota {dimensions = array<i32: 1>} : vector<8x128xi32>
      %c0_i32_37 = arith.constant 0 : i32
      %71 = vector.broadcast %c0_i32_37 : i32 to vector<8x128xi32>
      %72 = arith.cmpi eq, %70, %71 : vector<8x128xi32>
      %c1_i32_38 = arith.constant 1 : i32
      %73 = vector.broadcast %c1_i32_38 : i32 to vector<8x128xi32>
      %74 = arith.cmpi eq, %70, %73 : vector<8x128xi32>
      %c2_i32_39 = arith.constant 2 : i32
      %75 = vector.broadcast %c2_i32_39 : i32 to vector<8x128xi32>
      %76 = arith.cmpi eq, %70, %75 : vector<8x128xi32>
      %cst_40 = arith.constant 0.000000e+00 : f32
      %77 = vector.broadcast %69 : f32 to vector<8x128xf32>
      %78 = vector.broadcast %cst_40 : f32 to vector<8x128xf32>
      %79 = arith.select %76, %77, %78 : vector<8x128xi1>, vector<8x128xf32>
      %80 = vector.broadcast %64 : f32 to vector<8x128xf32>
      %81 = arith.select %74, %80, %79 : vector<8x128xi1>, vector<8x128xf32>
      %82 = vector.broadcast %59 : f32 to vector<8x128xf32>
      %83 = arith.select %72, %82, %81 : vector<8x128xi1>, vector<8x128xf32>
      %c0_41 = arith.constant 0 : index
      %c0_42 = arith.constant 0 : index
      %84 = vector.load %arg4[%c0_41, %c0_42] : memref<8x128xf32, #tpu.memory_space<vmem>>, vector<8x128xf32>
      tpu.vector_store %arg4[%c0_41, %c0_42], %83 {strides = array<i32>} : memref<8x128xf32, #tpu.memory_space<vmem>>, vector<8x128xf32>,
    } else {
    }
    return
  }
  func.func @transform_0(%arg0: i32, %arg1: i32) -> (i32, i32, i32) {
    %c0_i32 = arith.constant 0 : i32
    %c0_i32_0 = arith.constant 0 : i32
    return %arg0, %c0_i32, %arg1 : i32, i32, i32
  }
  func.func @transform_1(%arg0: i32, %arg1: i32) -> (i32, i32, i32) {
    %c0_i32 = arith.constant 0 : i32
    %c0_i32_0 = arith.constant 0 : i32
    return %arg0, %c0_i32, %arg1 : i32, i32, i32
  }
  func.func @transform_2(%arg0: i32, %arg1: i32) -> (i32, i32) {
    %c0_i32 = arith.constant 0 : i32
    %c0_i32_0 = arith.constant 0 : i32
    %c0_i32_1 = arith.constant 0 : i32
    return %c0_i32, %c0_i32_0 : i32, i32
  }
}

</mosaic_0001>

<llo_original>
// kernel: loli_loss.1
$region0: #{loli_loss.1}
  #allocation0 [shape = 'u32[]', space=smem, size = 0x4, offset = 0x4, fixed_abs, tag = 'smem constant byte address 0x4 - core index']
  #allocation1 [shape = 'u32[72,128]{1,0:T(1,128)}', space=vmem, size = 0x9000, scoped, tag = 'internal scratch']
  #allocation2 [shape = 'f32[8,128]{1,0:T(8,128)}', space=vmem, size = 0x1000, scoped, tag = 'scratch operand']
  #allocation3 [shape = 'f32[8,128]{1,0:T(8,128)}', space=vmem, size = 0x1000, scoped, tag = 'scratch operand']
  #allocation4 [shape = 'f32[8,128]{1,0:T(8,128)}', space=vmem, size = 0x1000, scoped, tag = 'scratch operand']
  %s0 = inlined_call_operand.vmem [shape: f32[2,8,128], index: 0, kind: input, shape index: {}]
  %s1 = inlined_call_operand.vmem [shape: f32[2,8,128], index: 1, kind: input, shape index: {}]
  %s2 = inlined_call_operand.vmem [shape: f32[8,128], index: 2, kind: output, shape index: {}]
  %s3 = sld [smem:[#allocation0]]
  $region49: #{loli_loss.1} parent=0
    _
  %s5 = ssub.s32 1, %s3
  %s6 = scalar_select 0, %s5, %s3
  loop: start=0, step=1, limit=4
  $region2: #{loli_loss.1} parent=0 // loop_pre_header
    _
  $region3: #{loli_loss.1} parent=0 // loop_header
    %s8 = sphi 0, %s12
    %p9 = scmp.ge.s32.totalorder %s8, 4
    %s15 = sphi 0, %s27
    %s16 = sphi 0, %s23
    %s17 = sphi 0, %s15
    %s18 = sphi 0, %s16
    %s19 = sphi 0, %s17
    %s20 = sphi 0, %s18
    %s32 = sphi 0, %s34
    %s35 = sphi 0, %s32
    %s36 = sphi 0, %s35
    %s52 = sphi 0, %s36
    %s60 = sphi 0, %s62
    %s63 = sphi 0, %s60
    %s64 = sphi 0, %s63
    %s80 = sphi 0, %s64
    %s84 = sphi 0, %s84
    %s86 = sphi 0, %s84
    %s87 = sphi 0, %s86
    %s101 = sphi 0, %s87
  $region4: #{loli_loss.1} parent=0 // loop_header_branch
    %11 = sbr.rel (%p9) target = $region8
  $region5: #{loli_loss.1} parent=0 // loop_body
    %s13 = ssub.s32 %s8, 1
    %s14 = ssub.s32 %s8, 2
    %s21 = sadd.s32 1, %s16
    %p22 = scmp.ge.s32.totalorder %s21, 1
    %s23 = scalar_select %p22, 0, %s21
    %s24 = sadd.s32 1, %s15
    %s25 = scalar_select %p22, %s24, %s15
    %p26 = scmp.ge.s32.totalorder %s25, 2
    %s27 = scalar_select %p26, 0, %s25
    %s28 = ssub.s32 %s15, %s27
    %s29 = ssub.s32 %s16, %s23
    %s30 = sor.u32 %s28, %s29
    %p31 = scmp.eq.s32.totalorder %s30, 0
    %s33 = sadd.s32 %s32, 1
    %s34 = scalar_select %p31, %s32, %s33
    %p37 = pneg %p31
    %p38 = scmp.eq.s32.totalorder %s8, 1
    %p39 = por %p37, %p38
    %p40 = scmp.ne.s32.totalorder %s32, %s35
    %p41 = scmp.eq.s32.totalorder %s8, 0
    %p42 = por %p40, %p41
    %p43 = scmp.ne.s32.totalorder %s32, %s35
    %p44 = scmp.eq.s32.totalorder %s13, 1
    %p45 = por %p43, %p44
    %p46 = scmp.ne.s32.totalorder %s35, %s36
    %p47 = scmp.eq.s32.totalorder %s13, 0
    %p48 = por %p46, %p47
    %p49 = scmp.ne.s32.totalorder %s35, %s36
    %p50 = scmp.eq.s32.totalorder %s14, 1
    %p51 = por %p49, %p50
    %p53 = scmp.ne.s32.totalorder %s36, %s52
    %p54 = scmp.eq.s32.totalorder %s14, 0
    %p55 = por %p53, %p54
    %s56 = ssub.s32 %s15, %s27
    %s57 = ssub.s32 %s16, %s23
    %s58 = sor.u32 %s56, %s57
    %p59 = scmp.eq.s32.totalorder %s58, 0
    %s61 = sadd.s32 %s60, 1
    %s62 = scalar_select %p59, %s60, %s61
    %p65 = pneg %p59
    %p66 = scmp.eq.s32.totalorder %s8, 1
    %p67 = por %p65, %p66
    %p68 = scmp.ne.s32.totalorder %s60, %s63
    %p69 = scmp.eq.s32.totalorder %s8, 0
    %p70 = por %p68, %p69
    %p71 = scmp.ne.s32.totalorder %s60, %s63
    %p72 = scmp.eq.s32.totalorder %s13, 1
    %p73 = por %p71, %p72
    %p74 = scmp.ne.s32.totalorder %s63, %s64
    %p75 = scmp.eq.s32.totalorder %s13, 0
    %p76 = por %p74, %p75
    %p77 = scmp.ne.s32.totalorder %s63, %s64
    %p78 = scmp.eq.s32.totalorder %s14, 1
    %p79 = por %p77, %p78
    %p81 = scmp.ne.s32.totalorder %s64, %s80
    %p82 = scmp.eq.s32.totalorder %s14, 0
    %p83 = por %p81, %p82
    %s85 = sadd.s32 %s84, 1
    %p88 = scmp.eq.s32.totalorder %s8, 1
    %p89 = scmp.ne.s32.totalorder %s84, %s86
    %p90 = scmp.eq.s32.totalorder %s8, 0
    %p91 = por %p89, %p90
    %p92 = scmp.ne.s32.totalorder %s84, %s86
    %p93 = scmp.eq.s32.totalorder %s13, 1
    %p94 = por %p92, %p93
    %p95 = scmp.ne.s32.totalorder %s86, %s87
    %p96 = scmp.eq.s32.totalorder %s13, 0
    %p97 = por %p95, %p96
    %p98 = scmp.ne.s32.totalorder %s86, %s87
    %p99 = scmp.eq.s32.totalorder %s14, 1
    %p100 = por %p98, %p99
    %p102 = scmp.ne.s32.totalorder %s87, %s101
    %p103 = scmp.eq.s32.totalorder %s14, 0
    %p104 = por %p102, %p103
    %p105 = scmp.le.s32.totalorder 1, %s8
    %p106 = scmp.lt.s32.totalorder %s8, 3
    %p107 = pnand %p105, %p106
    %p108 = pneg %p107
    // Predicated region
    $region9: #{loli_loss.1} parent=5 // pred_check
      _
    $region10: #{loli_loss.1} parent=5 // pred_check_branch
      %110 = sbr.rel (%p107) target = $region12
    $region11: #{loli_loss.1} parent=5 // pred_region
      %s111 = ssub.s32 %s8, 1
    $region12: #{loli_loss.1} parent=5 // pred_fallthru
      _
    %p112 = scmp.lt.s32.totalorder %s8, 2
    // Predicated region
    $region13: #{loli_loss.1} parent=5 // pred_check
      %p113 = pneg %p112
    $region14: #{loli_loss.1} parent=5 // pred_check_branch
      %115 = sbr.rel (%p113) target = $region16
    $region15: #{loli_loss.1} parent=5 // pred_region
      // Predicated region
      $region17: #{loli_loss.1} parent=15 // pred_check
        %p116 = pneg %p42
      $region18: #{loli_loss.1} parent=15 // pred_check_branch
        %118 = sbr.rel (%p116) target = $region20
      $region19: #{loli_loss.1} parent=15 // pred_region
        %p119 = scmp.lt.s32.totalorder %s15, 1
        %s120 = scalar_select %p119, %s15, 1
        %p121 = scmp.lt.s32.totalorder %s16, 0
        %s122 = scalar_select %p121, %s16, 0
        %s123 = sadd.s32 %s122, %s120
        %s124 = smul.addr %s123, 8
        %s125 = scalar_lea.vmem %s0, %s124
      $region20: #{loli_loss.1} parent=15 // pred_fallthru
        _
      // Predicated region
      $region21: #{loli_loss.1} parent=15 // pred_check
        %p126 = pneg %p70
      $region22: #{loli_loss.1} parent=15 // pred_check_branch
        %128 = sbr.rel (%p126) target = $region24
      $region23: #{loli_loss.1} parent=15 // pred_region
        %p129 = scmp.lt.s32.totalorder %s15, 1
        %s130 = scalar_select %p129, %s15, 1
        %p131 = scmp.lt.s32.totalorder %s16, 0
        %s132 = scalar_select %p131, %s16, 0
        %s133 = sadd.s32 %s132, %s130
        %s134 = smul.addr %s133, 8
        %s135 = scalar_lea.vmem %s1, %s134
      $region24: #{loli_loss.1} parent=15 // pred_fallthru
        _
    $region16: #{loli_loss.1} parent=5 // pred_fallthru
      _
    %p136 = scmp.le.s32.totalorder 1, %s8
    %p137 = scmp.lt.s32.totalorder %s8, 3
    %p138 = pnand %p136, %p137
    %p139 = pneg %p138
    // Predicated region
    $region25: #{loli_loss.1} parent=5 // pred_check
      _
    $region26: #{loli_loss.1} parent=5 // pred_check_branch
      %141 = sbr.rel (%p138) target = $region28
    $region27: #{loli_loss.1} parent=5 // pred_region
      %s142 = ssub.s32 %s8, 1
      %p143 = scmp.lt.s32.totalorder %s17, 1
      %s144 = scalar_select %p143, %s17, 1
      %p145 = scmp.lt.s32.totalorder %s18, 0
      %s146 = scalar_select %p145, %s18, 0
      %s147 = sadd.s32 %s146, %s144
      %s148 = smul.addr %s147, 8
      %s149 = scalar_lea.vmem %s0, %s148
      %p150 = pneg %p48
      %p151 = pneg %p45
      %p152 = scmp.lt.s32.totalorder %s17, 1
      %s153 = scalar_select %p152, %s17, 1
      %p154 = scmp.lt.s32.totalorder %s18, 0
      %s155 = scalar_select %p154, %s18, 0
      %s156 = sadd.s32 %s155, %s153
      %s157 = smul.addr %s156, 8
      %s158 = scalar_lea.vmem %s1, %s157
      %p159 = pneg %p76
      %p160 = pneg %p73
      %p161 = pneg %p97
      %p162 = pneg %p94
      %p163 = scmp.lt.s32.totalorder %s17, 1
      %s164 = scalar_select %p163, %s17, 1
      %p165 = scmp.lt.s32.totalorder %s18, 0
      %s166 = scalar_select %p165, %s18, 0
      %s167 = sadd.s32 %s166, %s164
      %s168 = smul.addr %s167, 8
      %s169 = scalar_lea.vmem %s0, %s168
      %p170 = scmp.lt.s32.totalorder %s17, 1
      %s171 = scalar_select %p170, %s17, 1
      %p172 = scmp.lt.s32.totalorder %s18, 0
      %s173 = scalar_select %p172, %s18, 0
      %s174 = sadd.s32 %s173, %s171
      %s175 = smul.addr %s174, 8
      %s176 = scalar_lea.vmem %s1, %s175
      %p177 = scmp.eq.s32.totalorder %s17, 0
      %p178 = scmp.eq.s32.totalorder %s18, 0
      %p179 = pnand %p177, %p178
      %p180 = pneg %p179
      // Predicated region
      $region29: #{loli_loss.1} parent=27 // pred_check
        _
      $region30: #{loli_loss.1} parent=27 // pred_check_branch
        %182 = sbr.rel (%p179) target = $region32
      $region31: #{loli_loss.1} parent=27 // pred_region
        %183 = vst [vmem:[#allocation2] sm:$0xff] 0.0
        %184 = vst [vmem:[#allocation3] sm:$0xff] 0.0
        %185 = vst [vmem:[#allocation4] sm:$0xff] 0.0
      $region32: #{loli_loss.1} parent=27 // pred_fallthru
        _
      %v186 = vld [vmem:[%s169] sm:$0xff]
      %v187 = vld [vmem:[%s176] sm:$0xff]
      %v188 = vsub.f32 %v186, %v187
      %v189 = vld [vmem:[#allocation2] sm:$0xff]
      %v190 = vmul.f32 %v188, %v188
      %v191 = vadd.f32 %v189, %v190
      %192 = vst [vmem:[#allocation2] sm:$0xff] %v191
      %v193 = vld [vmem:[#allocation3] sm:$0xff]
      %v194 = vand.u32 2147483647, %v188
      %v195 = vadd.f32 %v193, %v194
      %196 = vst [vmem:[#allocation3] sm:$0xff] %v195
      %v197 = vmul.f32 %v186, %v187
      %v198 = vrot.slane %v197, 6
      %v199 = vadd.f32 %v197, %v198
      %v200 = vrot.slane %v197, 4
      %v201 = vadd.f32 %v199, %v200
      %v202 = vrot.slane %v197, 2
      %v203 = vadd.f32 %v201, %v202
      %v204 = vmul.f32 %v186, %v186
      %v205 = vrot.slane %v204, 6
      %v206 = vadd.f32 %v204, %v205
      %v207 = vrot.slane %v204, 4
      %v208 = vadd.f32 %v206, %v207
      %v209 = vrot.slane %v204, 2
      %v210 = vadd.f32 %v208, %v209
      %v211 = vmul.f32 %v187, %v187
      %v212 = vrot.slane %v211, 6
      %v213 = vadd.f32 %v211, %v212
      %v214 = vrot.slane %v211, 4
      %v215 = vadd.f32 %v213, %v214
      %v216 = vrot.slane %v211, 2
      %v217 = vadd.f32 %v215, %v216
      %v218 = vmax.f32 %v210, 1e-16
      %v219 = vrsqrt.pop %v218
      %v220 = vmul.f32 %v219, %v218
      %v221 = vmul.f32 %v220, %v219
      %v222 = vmul.f32 0.5, %v221
      %v223 = vsub.f32 1.5, %v222
      %v224 = vmul.f32 %v219, %v223
      %vm225 = vweird.f32 %v218
      %vm226 = vweird.f32 %v219
      %vm227 = vmor %vm225, %vm226
      %v228 = vsel %vm227, %v219, %v224
      %v229 = vmax.f32 %v217, 1e-16
      %v230 = vrsqrt.pop %v229
      %v231 = vmul.f32 %v230, %v229
      %v232 = vmul.f32 %v231, %v230
      %v233 = vmul.f32 0.5, %v232
      %v234 = vsub.f32 1.5, %v233
      %v235 = vmul.f32 %v230, %v234
      %vm236 = vweird.f32 %v229
      %vm237 = vweird.f32 %v230
      %vm238 = vmor %vm236, %vm237
      %v239 = vsel %vm238, %v230, %v235
      %v240 = vmul.f32 %v228, %v239
      %v241 = vmul.f32 %v203, %v240
      %v242 = vld [vmem:[#allocation4] sm:$0xff]
      %v243 = vadd.f32 %v242, %v241
      %244 = vst [vmem:[#allocation4] sm:$0xff] %v243
      %p245 = scmp.eq.s32.totalorder %s17, 1
      %p246 = pnand %p245, %p178
      %p247 = pneg %p246
      // Predicated region
      $region33: #{loli_loss.1} parent=27 // pred_check
        _
      $region34: #{loli_loss.1} parent=27 // pred_check_branch
        %249 = sbr.rel (%p246) target = $region36
      $region35: #{loli_loss.1} parent=27 // pred_region
        %v250 = vld [vmem:[#allocation2] sm:$0xff]
        %251 = vadd.xlane.f32.xlu0 %v250
        %v252 = vpop.xlane.xlu0 %251
        %v253 = vrot.slane %v252, 4
        %v254 = vadd.f32 %v252, %v253
        %v255 = vrot.slane %v254, 2
        %v256 = vadd.f32 %v254, %v255
        %v257 = vrot.slane %v256, 1
        %v258 = vadd.f32 %v256, %v257
        %s259 = vtos %v258
        %v260 = vld [vmem:[#allocation3] sm:$0xff]
        %261 = vadd.xlane.f32.xlu0 %v260
        %v262 = vpop.xlane.xlu0 %261
        %v263 = vrot.slane %v262, 4
        %v264 = vadd.f32 %v262, %v263
        %v265 = vrot.slane %v264, 2
        %v266 = vadd.f32 %v264, %v265
        %v267 = vrot.slane %v266, 1
        %v268 = vadd.f32 %v266, %v267
        %s269 = vtos %v268
        %v270 = vld [vmem:[#allocation4] sm:$0xff]
        %271 = vadd.xlane.f32.xlu0 %v270
        %v272 = vpop.xlane.xlu0 %271
        %v273 = vrot.slane %v272, 4
        %v274 = vadd.f32 %v272, %v273
        %v275 = vrot.slane %v274, 2
        %v276 = vadd.f32 %v274, %v275
        %v277 = vrot.slane %v276, 1
        %v278 = vadd.f32 %v276, %v277
        %s279 = vtos %v278
        %v280 = vlaneseq
        %v281 = vand.u32 %v280, 127
        %vm282 = vcmp.eq.s32.totalorder %v281, 0
        %vm283 = vcmp.eq.s32.totalorder %v281, 1
        %vm284 = vcmp.eq.s32.totalorder %v281, 2
        %v285 = vstv %s279
        %v286 = vsel %vm284, %v285, 0.0
        %v287 = vstv %s269
        %v288 = vsel %vm283, %v287, %v286
        %v289 = vstv %s259
        %v290 = vsel %vm282, %v289, %v288
        %291 = vst [vmem:[%s2] sm:$0xff] %v290
      $region36: #{loli_loss.1} parent=27 // pred_fallthru
        _
      // Predicated region
      $region37: #{loli_loss.1} parent=27 // pred_check
        %p292 = pneg %p94
      $region38: #{loli_loss.1} parent=27 // pred_check_branch
        %294 = sbr.rel (%p292) target = $region40
      $region39: #{loli_loss.1} parent=27 // pred_region
        _
      $region40: #{loli_loss.1} parent=27 // pred_fallthru
        _
      // Predicated region
      $region41: #{loli_loss.1} parent=27 // pred_check
        %p295 = pneg %p94
      $region42: #{loli_loss.1} parent=27 // pred_check_branch
        %297 = sbr.rel (%p295) target = $region44
      $region43: #{loli_loss.1} parent=27 // pred_region
        _
      $region44: #{loli_loss.1} parent=27 // pred_fallthru
        _
    $region28: #{loli_loss.1} parent=5 // pred_fallthru
      _
    %p298 = scmp.le.s32.totalorder 2, %s8
    // Predicated region
    $region45: #{loli_loss.1} parent=5 // pred_check
      %p299 = pneg %p298
    $region46: #{loli_loss.1} parent=5 // pred_check_branch
      %301 = sbr.rel (%p299) target = $region48
    $region47: #{loli_loss.1} parent=5 // pred_region
      %s302 = ssub.s32 %s8, 2
    $region48: #{loli_loss.1} parent=5 // pred_fallthru
      _
  $region6: #{loli_loss.1} parent=0 // loop_footer
    %s12 = sadd.s32 1, %s8
  $region7: #{loli_loss.1} parent=0 // loop_footer_branch
    %7 = sbr.rel target = $region3
  $region8: #{loli_loss.1} parent=0 // loop_exit
    _

</llo_original>
